<compile_context>
chip_gen: v7x
topology: tpu7x:2x2x1
jax: 0.10.0
libtpu: 0.0.40
codegen_flags: <defaults>
</compile_context>

<pallas_src>
import functools

import jax
import jax.numpy as jnp
import numpy as np
from jax import lax
from jax.experimental import pallas as pl
from jax.experimental.pallas import tpu as pltpu


def _round_up(x, m):
    return (x + m - 1) // m * m


def mlp_kernel(x_ref, w1_ref, b1_ref, w2_ref, b2_ref, o_ref, *, activation):
    # x_ref:  (TB, IN)  VMEM
    # w1_ref: (IN, H)   VMEM  (constant block across the grid)
    # b1_ref: (1, H)    VMEM  (constant block across the grid)
    # w2_ref: (1, H)    VMEM  (constant block; native PyTorch (out, in) layout)
    # b2_ref: (1, 1)    SMEM  (scalar)
    # o_ref:  (1, TB)   VMEM  (batch on lanes -> lane-dense, unmasked stores)
    h = jnp.dot(x_ref[...], w1_ref[...], preferred_element_type=jnp.float32)
    h = h + b1_ref[...]
    if activation == "relu":
        h = jnp.maximum(h, 0.0)
    elif activation == "tanh":
        h = jnp.tanh(h)
    else:
        raise ValueError(f"Unsupported activation: {activation}")
    # Second Linear (H -> 1): contract the hidden dim of both operands
    # (i.e. w2 @ h^T). The result is (1, TB): the batch lands on lanes, so the
    # final store is lane-dense with no transpose/reshape needed.
    o = lax.dot_general(
        w2_ref[...], h,
        dimension_numbers=(((1,), (1,)), ((), ())),
        preferred_element_type=jnp.float32,
    )
    o_ref[...] = (o + b2_ref[0, 0]).astype(o_ref.dtype)


def mlp_forward(x, w1_t, b1, w2, b2, *, tile_b=None, activation="relu"):
    """Pallas forward for Linear -> activation -> Linear.

    x:    (B, IN)  float32
    w1_t: (IN, H)  float32  (transposed PyTorch weight of the first Linear)
    b1:   (1, H)   float32
    w2:   (1, H)   float32  (native PyTorch (out, in) weight of the second Linear)
    b2:   (1, 1)   float32
    returns (B, 1) float32
    """
    B, IN = x.shape
    H = w1_t.shape[1]

    # Pick a batch tile: a multiple of 128 (lane-dense output), big enough to
    # amortize per-grid-step overhead, and split into >=2 grid steps at large
    # batch so v7x's two TensorCores both get work under "parallel" semantics.
    if tile_b is None:
        if B <= 256:
            tile_b = _round_up(B, 128)          # 1-2 steps for small batches
        else:
            tile_b = min(2048, _round_up((B + 1) // 2, 128))
    tile_b = _round_up(tile_b, 128)

    # Pad the batch instead of asserting divisibility; padded rows are sliced
    # off after the kernel.
    b_pad = _round_up(B, tile_b)
    if b_pad != B:
        x = jnp.pad(x, ((0, b_pad - B), (0, 0)))
    num_tiles = b_pad // tile_b

    cost = pl.CostEstimate(
        flops=2 * b_pad * IN * H + 2 * b_pad * H,
        transcendentals=(b_pad * H if activation == "tanh" else 0),
        bytes_accessed=4 * (b_pad * IN + b_pad + IN * H + 2 * H + 1),
    )

    out = pl.pallas_call(
        functools.partial(mlp_kernel, activation=activation),
        out_shape=jax.ShapeDtypeStruct((1, b_pad), jnp.float32),
        grid_spec=pltpu.PrefetchScalarGridSpec(
            num_scalar_prefetch=0,
            grid=(num_tiles,),
            in_specs=[
                pl.BlockSpec((tile_b, IN), lambda i: (i, 0)),        # x: tiled over batch
                pl.BlockSpec((IN, H), lambda i: (0, 0)),             # w1: constant block
                pl.BlockSpec((1, H), lambda i: (0, 0)),              # b1: constant block
                pl.BlockSpec((1, H), lambda i: (0, 0)),              # w2: constant block
                pl.BlockSpec(memory_space=pltpu.MemorySpace.SMEM),   # b2: scalar in SMEM
            ],
            out_specs=pl.BlockSpec((1, tile_b), lambda i: (0, i)),   # lane-dense output
        ),
        compiler_params=pltpu.CompilerParams(
            dimension_semantics=("parallel",),
        ),
        cost_estimate=cost,
    )(x, w1_t, b1, w2, b2)

    # (1, b_pad) -> (B, 1), dropping the batch padding.
    return out[0, :B].reshape(B, 1)


def init_params(key, in_dim=10, hidden=10, out_dim=1):
    """Deterministic init mimicking PyTorch nn.Linear default:
    U(-1/sqrt(fan_in), 1/sqrt(fan_in)) for both weight and bias."""
    k1, k2, k3, k4 = jax.random.split(key, 4)
    bound1 = 1.0 / np.sqrt(in_dim)
    bound2 = 1.0 / np.sqrt(hidden)
    # First layer stored transposed (in, out); second layer kept in PyTorch
    # (out, in) layout since the kernel contracts its last dim directly.
    w1_t = jax.random.uniform(k1, (in_dim, hidden), jnp.float32, -bound1, bound1)
    b1 = jax.random.uniform(k2, (1, hidden), jnp.float32, -bound1, bound1)
    w2 = jax.random.uniform(k3, (out_dim, hidden), jnp.float32, -bound2, bound2)
    b2 = jax.random.uniform(k4, (1, out_dim), jnp.float32, -bound2, bound2)
    return w1_t, b1, w2, b2


def mlp_reference(x, w1_t, b1, w2, b2, activation="relu"):
    h = x @ w1_t + b1
    h = jnp.maximum(h, 0.0) if activation == "relu" else jnp.tanh(h)
    return h @ w2.T + b2


# TODO(synk): fit()/predict() training plumbing (Adam/SGD/LBFGS, MSELoss, epochs)
# is host-side orchestration, not part of the forward pass, and is not kernelized.

if __name__ == "__main__":
    key = jax.random.PRNGKey(0)
    kx, kp = jax.random.split(key)

    B, IN, H = 32, 10, 10  # matches defaults: input_dim=10, hidden_layer_sizes=(10,)
    x = jax.random.normal(kx, (B, IN), jnp.float32)
    w1_t, b1, w2, b2 = init_params(kp, in_dim=IN, hidden=H, out_dim=1)

    out = mlp_forward(x, w1_t, b1, w2, b2, activation="relu")
    out = jax.block_until_ready(out)

    ref = mlp_reference(x, w1_t, b1, w2, b2, activation="relu")
    np.testing.assert_allclose(np.asarray(out), np.asarray(ref), rtol=1e-5, atol=1e-5)

    print("KERNEL_OK")
</pallas_src>

<mosaic_0001>
module attributes {stable_mosaic.version = 11 : i64} {
  func.func @mlp_kernel(%arg0: i32, %arg1: memref<128x10xf32, #tpu.memory_space<vmem>>, %arg2: memref<10x10xf32, #tpu.memory_space<vmem>>, %arg3: memref<1x10xf32, #tpu.memory_space<vmem>>, %arg4: memref<1x10xf32, #tpu.memory_space<vmem>>, %arg5: memref<1x1xf32, #tpu.memory_space<smem>>, %arg6: memref<1x128xf32, #tpu.memory_space<vmem>>) attributes {dimension_semantics = [#tpu.dimension_semantics<parallel>], iteration_bounds = array<i64: 1>, scalar_prefetch = 0 : i64, scratch_operands = 0 : i64, tpu.core_type = #tpu.core_type<tc>, window_params = [{transform_indices = @transform_0, window_bounds = array<i64: 128, 10>}, {pipeline_mode = #tpu.pipeline_mode<synchronous>, transform_indices = @transform_1, window_bounds = array<i64: 10, 10>}, {pipeline_mode = #tpu.pipeline_mode<synchronous>, transform_indices = @transform_2, window_bounds = array<i64: 1, 10>}, {pipeline_mode = #tpu.pipeline_mode<synchronous>, transform_indices = @transform_3, window_bounds = array<i64: 1, 10>}, {transform_indices = @transform_4, window_bounds = array<i64: 1, 1>}, {transform_indices = @transform_5, window_bounds = array<i64: 1, 128>}]} {
    %c0 = arith.constant 0 : index
    %c0_0 = arith.constant 0 : index
    %0 = vector.load %arg1[%c0, %c0_0] : memref<128x10xf32, #tpu.memory_space<vmem>>, vector<128x10xf32>
    %c0_1 = arith.constant 0 : index
    %c0_2 = arith.constant 0 : index
    %1 = vector.load %arg2[%c0_1, %c0_2] : memref<10x10xf32, #tpu.memory_space<vmem>>, vector<10x10xf32>
    %cst = arith.constant dense<0.000000e+00> : vector<128x10xf32>
    %2 = tpu.matmul %0, %1, %cst {dimension_numbers = #tpu.dot_dimension_numbers<[1], [0], [0], [1], [0, 0, 1, 1], [], []>} : vector<128x10xf32>, vector<10x10xf32>, vector<128x10xf32> -> vector<128x10xf32>
    %c0_3 = arith.constant 0 : index
    %c0_4 = arith.constant 0 : index
    %3 = vector.load %arg3[%c0_3, %c0_4] : memref<1x10xf32, #tpu.memory_space<vmem>>, vector<1x10xf32>
    %4 = vector.broadcast %3 : vector<1x10xf32> to vector<128x10xf32>
    %5 = arith.addf %2, %4 : vector<128x10xf32>
    %cst_5 = arith.constant 0.000000e+00 : f32
    %6 = vector.broadcast %cst_5 : f32 to vector<128x10xf32>
    %7 = arith.maximumf %5, %6 : vector<128x10xf32>
    %c0_6 = arith.constant 0 : index
    %c0_7 = arith.constant 0 : index
    %8 = vector.load %arg4[%c0_6, %c0_7] : memref<1x10xf32, #tpu.memory_space<vmem>>, vector<1x10xf32>
    %cst_8 = arith.constant dense<0.000000e+00> : vector<1x128xf32>
    %9 = tpu.matmul %8, %7, %cst_8 {dimension_numbers = #tpu.dot_dimension_numbers<[1], [1], [0], [0], [0, 0, 1, 0], [], []>} : vector<1x10xf32>, vector<128x10xf32>, vector<1x128xf32> -> vector<1x128xf32>
    %c0_9 = arith.constant 0 : index
    %c0_10 = arith.constant 0 : index
    %10 = memref.load %arg5[%c0_9, %c0_10] : memref<1x1xf32, #tpu.memory_space<smem>>
    %11 = vector.broadcast %10 : f32 to vector<1x128xf32>
    %12 = arith.addf %9, %11 : vector<1x128xf32>
    %c0_11 = arith.constant 0 : index
    %c0_12 = arith.constant 0 : index
    %13 = vector.load %arg6[%c0_11, %c0_12] : memref<1x128xf32, #tpu.memory_space<vmem>>, vector<1x128xf32>
    tpu.vector_store %arg6[%c0_11, %c0_12], %12 {strides = array<i32>} : memref<1x128xf32, #tpu.memory_space<vmem>>, vector<1x128xf32>,
    return
  }
  func.func @transform_0(%arg0: i32) -> (i32, i32) {
    %c0_i32 = arith.constant 0 : i32
    %c0_i32_0 = arith.constant 0 : i32
    return %arg0, %c0_i32 : i32, i32
  }
  func.func @transform_1(%arg0: i32) -> (i32, i32) {
    %c0_i32 = arith.constant 0 : i32
    %c0_i32_0 = arith.constant 0 : i32
    %c0_i32_1 = arith.constant 0 : i32
    return %c0_i32, %c0_i32_0 : i32, i32
  }
  func.func @transform_2(%arg0: i32) -> (i32, i32) {
    %c0_i32 = arith.constant 0 : i32
    %c0_i32_0 = arith.constant 0 : i32
    %c0_i32_1 = arith.constant 0 : i32
    return %c0_i32, %c0_i32_0 : i32, i32
  }
  func.func @transform_3(%arg0: i32) -> (i32, i32) {
    %c0_i32 = arith.constant 0 : i32
    %c0_i32_0 = arith.constant 0 : i32
    %c0_i32_1 = arith.constant 0 : i32
    return %c0_i32, %c0_i32_0 : i32, i32
  }
  func.func @transform_4(%arg0: i32) -> (i32, i32) {
    %c0_i32 = arith.constant 0 : i32
    %c0_i32_0 = arith.constant 0 : i32
    %c0_i32_1 = arith.constant 0 : i32
    return %c0_i32, %c0_i32_0 : i32, i32
  }
  func.func @transform_5(%arg0: i32) -> (i32, i32) {
    %c0_i32 = arith.constant 0 : i32
    %c0_i32_0 = arith.constant 0 : i32
    return %c0_i32, %arg0 : i32, i32
  }
}

</mosaic_0001>

<llo_original>
// kernel: tpu_custom_call.1
$region0: #{tpu_custom_call.1}
  #allocation0 [shape = 'u32[]', space=smem, size = 0x4, offset = 0x4, fixed_abs, tag = 'smem constant byte address 0x4 - core index']
  #allocation1 [shape = 'u32[144,128]{1,0:T(1,128)}', space=vmem, size = 0x12000, scoped, tag = 'internal scratch']
  #allocation2 [shape = 'f32[1,1]{1,0:T(1,128)S(6)}', space=smem, size = 0x200, scoped, tag = 'scoped memory for tpu_custom_call.1']
  %s0 = inlined_call_operand.vmem [shape: f32[128,10], index: 0, kind: input, shape index: {}]
  %s1 = inlined_call_operand.vmem [shape: f32[10,10], index: 1, kind: input, shape index: {}]
  %s2 = inlined_call_operand.vmem [shape: f32[1,10], index: 2, kind: input, shape index: {}]
  %s3 = inlined_call_operand.vmem [shape: f32[1,10], index: 3, kind: input, shape index: {}]
  %s4 = inlined_call_operand.<no memory space> [shape: f32[1,1], index: 4, kind: input, shape index: {}]
  %s5 = inlined_call_operand.hbm [shape: f32[1,128], index: 5, kind: output, shape index: {}]
  %s6 = sld [smem:[#allocation0]]
  $region30: #{tpu_custom_call.1} parent=0
    _
  %s8 = ssub.s32 1, %s6
  %s9 = scalar_select 0, %s8, %s6
  %10 = sst [smem:[#allocation2]] %s4
  $region1: #{tpu_custom_call.1} parent=0
    #allocation3 [shape = 'u8[512]{0}', space=vmem, size = 0x400, scoped, tag = 'output window, operand 0, single buffered']
    #allocation4 [shape = 's32[1]{0}', space=sflag, size = 0x4, scoped, tag = 'scoped memory for tpu_custom_call.1']
    %11 = vsyncpa [#allocation4], 0
    // Predicated region
    $region2: #{tpu_custom_call.1} parent=1 // pred_check
      _
    $region3: #{tpu_custom_call.1} parent=1 // pred_check_branch
      %13 = sbr.rel (0) target = $region5
    $region4: #{tpu_custom_call.1} parent=1 // pred_region
      _
    $region5: #{tpu_custom_call.1} parent=1 // pred_fallthru
      _
    // Predicated region
    $region6: #{tpu_custom_call.1} parent=1 // pred_check
      _
    $region7: #{tpu_custom_call.1} parent=1 // pred_check_branch
      %15 = sbr.rel (0) target = $region9
    $region8: #{tpu_custom_call.1} parent=1 // pred_region
      _
    $region9: #{tpu_custom_call.1} parent=1 // pred_fallthru
      _
    // Predicated region
    $region10: #{tpu_custom_call.1} parent=1 // pred_check
      _
    $region11: #{tpu_custom_call.1} parent=1 // pred_check_branch
      %17 = sbr.rel (0) target = $region13
    $region12: #{tpu_custom_call.1} parent=1 // pred_region
      _
    $region13: #{tpu_custom_call.1} parent=1 // pred_fallthru
      _
    // Predicated region
    $region14: #{tpu_custom_call.1} parent=1 // pred_check
      _
    $region15: #{tpu_custom_call.1} parent=1 // pred_check_branch
      %19 = sbr.rel (0) target = $region17
    $region16: #{tpu_custom_call.1} parent=1 // pred_region
      _
    $region17: #{tpu_custom_call.1} parent=1 // pred_fallthru
      _
    // Predicated region
    $region18: #{tpu_custom_call.1} parent=1 // pred_check
      _
    $region19: #{tpu_custom_call.1} parent=1 // pred_check_branch
      %21 = sbr.rel (0) target = $region21
    $region20: #{tpu_custom_call.1} parent=1 // pred_region
      _
    $region21: #{tpu_custom_call.1} parent=1 // pred_fallthru
      _
    %v22 = vld [vmem:[%s0] sm:$0xff]
    %v23 = vld [vmem:[%s0 + $0x8] sm:$0xff]
    %v24 = vld [vmem:[%s0 + $0x10] sm:$0xff]
    %v25 = vld [vmem:[%s0 + $0x18] sm:$0xff]
    %v26 = vld [vmem:[%s0 + $0x20] sm:$0xff]
    %v27 = vld [vmem:[%s0 + $0x28] sm:$0xff]
    %v28 = vld [vmem:[%s0 + $0x30] sm:$0xff]
    %v29 = vld [vmem:[%s0 + $0x38] sm:$0xff]
    %v30 = vld [vmem:[%s0 + $0x40] sm:$0xff]
    %v31 = vld [vmem:[%s0 + $0x48] sm:$0xff]
    %v32 = vld [vmem:[%s0 + $0x50] sm:$0xff]
    %v33 = vld [vmem:[%s0 + $0x58] sm:$0xff]
    %v34 = vld [vmem:[%s0 + $0x60] sm:$0xff]
    %v35 = vld [vmem:[%s0 + $0x68] sm:$0xff]
    %v36 = vld [vmem:[%s0 + $0x70] sm:$0xff]
    %v37 = vld [vmem:[%s0 + $0x78] sm:$0xff]
    %v38 = vld [vmem:[%s1] sm:$0xff]
    %v39 = vld [vmem:[%s1 + $0x8] sm:$0x3]
    %v40 = vld [vmem:[%s2] sm:$0x1]
    %v42 = vlaneseq
    %v43 = vshrl.u32 %v42, 7
    %v44 = vsub.s32 0, %v43
    %v45 = vrot.slane %v40, %v44
    %vm47 = vcmask 80896
    %v49 = vsel %vm47, %v22, 0
    %v52 = vsel %vm47, %v23, 0
    %v55 = vsel %vm47, %v24, 0
    %v58 = vsel %vm47, %v25, 0
    %v61 = vsel %vm47, %v26, 0
    %v64 = vsel %vm47, %v27, 0
    %v67 = vsel %vm47, %v28, 0
    %v70 = vsel %vm47, %v29, 0
    %v73 = vsel %vm47, %v30, 0
    %v76 = vsel %vm47, %v31, 0
    %v79 = vsel %vm47, %v32, 0
    %v82 = vsel %vm47, %v33, 0
    %v85 = vsel %vm47, %v34, 0
    %v88 = vsel %vm47, %v35, 0
    %v91 = vsel %vm47, %v36, 0
    %v94 = vsel %vm47, %v37, 0
    %vm96 = vcmask 1041408
    %v98 = vsel %vm96, %v39, 0
    %100 = vmatprep.subr.mxu0 0.0
    %101 = vmatpush1.msra.mxu0 %v38
    %102 = vmatprep.subr.mxu0 0.0
    %103 = vmatpush1.msra.mxu0 %v98
    %104 = vmatprep.subr.mxu0 0.0
    %105 = vmatpush1.msra.mxu0 0.0
    %106 = vmatprep.subr.mxu0 0.0
    %107 = vmatpush1.msra.mxu0 0.0
    %108 = vmatprep.subr.mxu0 0.0
    %109 = vmatpush1.msra.mxu0 0.0
    %110 = vmatprep.subr.mxu0 0.0
    %111 = vmatpush1.msra.mxu0 0.0
    %112 = vmatprep.subr.mxu0 0.0
    %113 = vmatpush1.msra.mxu0 0.0
    %114 = vmatprep.subr.mxu0 0.0
    %115 = vmatpush1.msra.mxu0 0.0
    %116 = vmatprep.subr.mxu0 0.0
    %117 = vmatpush1.msra.mxu0 0.0
    %118 = vmatprep.subr.mxu0 0.0
    %119 = vmatpush1.msra.mxu0 0.0
    %120 = vmatprep.subr.mxu0 0.0
    %121 = vmatpush1.msra.mxu0 0.0
    %122 = vmatprep.subr.mxu0 0.0
    %123 = vmatpush1.msra.mxu0 0.0
    %124 = vmatprep.subr.mxu0 0.0
    %125 = vmatpush1.msra.mxu0 0.0
    %126 = vmatprep.subr.mxu0 0.0
    %127 = vmatpush1.msra.mxu0 0.0
    %128 = vmatprep.subr.mxu0 0.0
    %129 = vmatpush1.msra.mxu0 0.0
    %130 = vmatprep.subr.mxu0 0.0
    %131 = vmatpush1.msra.mxu0 0.0
    %132 = vmatprep.subr.mxu0 0.0
    %133 = vmatpush1.msra.mxu0 0.0
    %134 = vmatprep.subr.mxu0 0.0
    %135 = vmatpush1.msra.mxu0 0.0
    %136 = vmatprep.subr.mxu0 0.0
    %137 = vmatpush1.msra.mxu0 0.0
    %138 = vmatprep.subr.mxu0 0.0
    %139 = vmatpush1.msra.mxu0 0.0
    %140 = vmatprep.subr.mxu0 0.0
    %141 = vmatpush1.msra.mxu0 0.0
    %142 = vmatprep.subr.mxu0 0.0
    %143 = vmatpush1.msra.mxu0 0.0
    %144 = vmatprep.subr.mxu0 0.0
    %145 = vmatpush1.msra.mxu0 0.0
    %146 = vmatprep.subr.mxu0 0.0
    %147 = vmatpush1.msra.mxu0 0.0
    %148 = vmatprep.subr.mxu0 0.0
    %149 = vmatpush1.msra.mxu0 0.0
    %150 = vmatprep.subr.mxu0 0.0
    %151 = vmatpush1.msra.mxu0 0.0
    %152 = vmatprep.subr.mxu0 0.0
    %153 = vmatpush1.msra.mxu0 0.0
    %154 = vmatprep.subr.mxu0 0.0
    %155 = vmatpush1.msra.mxu0 0.0
    %156 = vmatprep.subr.mxu0 0.0
    %157 = vmatpush1.msra.mxu0 0.0
    %158 = vmatprep.subr.mxu0 0.0
    %159 = vmatpush1.msra.mxu0 0.0
    %160 = vmatprep.subr.mxu0 0.0
    %161 = vmatpush1.msra.mxu0 0.0
    %162 = vmatprep.subr.mxu0 0.0
    %163 = vmatpush1.msra.mxu0 0.0
    %164 = vmatprep.mubr.f32.mxu0 0.0
    %165 = vmatmul.mubr.f32.gmra.mrb[0].mxu0 %v49
    %v166 = vpop.f32.mrb[0].mxu0
    %v167 = vadd.f32 %v45, %v166
    %v168 = vpop.f32.mrb[0].mxu0
    %169 = vmatprep.mubr.f32.mxu0 0.0
    %170 = vmatmul.mubr.f32.gmra.mrb[0].mxu0 %v52
    %v171 = vpop.f32.mrb[0].mxu0
    %v172 = vadd.f32 %v45, %v171
    %v173 = vpop.f32.mrb[0].mxu0
    %174 = vmatprep.mubr.f32.mxu0 0.0
    %175 = vmatmul.mubr.f32.gmra.mrb[0].mxu0 %v55
    %v176 = vpop.f32.mrb[0].mxu0
    %v177 = vadd.f32 %v45, %v176
    %v178 = vpop.f32.mrb[0].mxu0
    %179 = vmatprep.mubr.f32.mxu0 0.0
    %180 = vmatmul.mubr.f32.gmra.mrb[0].mxu0 %v58
    %v181 = vpop.f32.mrb[0].mxu0
    %v182 = vadd.f32 %v45, %v181
    %v183 = vpop.f32.mrb[0].mxu0
    %184 = vmatprep.mubr.f32.mxu0 0.0
    %185 = vmatmul.mubr.f32.gmra.mrb[0].mxu0 %v61
    %v186 = vpop.f32.mrb[0].mxu0
    %v187 = vadd.f32 %v45, %v186
    %v188 = vpop.f32.mrb[0].mxu0
    %189 = vmatprep.mubr.f32.mxu0 0.0
    %190 = vmatmul.mubr.f32.gmra.mrb[0].mxu0 %v64
    %v191 = vpop.f32.mrb[0].mxu0
    %v192 = vadd.f32 %v45, %v191
    %v193 = vpop.f32.mrb[0].mxu0
    %194 = vmatprep.mubr.f32.mxu0 0.0
    %195 = vmatmul.mubr.f32.gmra.mrb[0].mxu0 %v67
    %v196 = vpop.f32.mrb[0].mxu0
    %v197 = vadd.f32 %v45, %v196
    %v198 = vpop.f32.mrb[0].mxu0
    %199 = vmatprep.mubr.f32.mxu0 0.0
    %200 = vmatmul.mubr.f32.gmra.mrb[0].mxu0 %v70
    %v201 = vpop.f32.mrb[0].mxu0
    %v202 = vadd.f32 %v45, %v201
    %v203 = vpop.f32.mrb[0].mxu0
    %204 = vmatprep.mubr.f32.mxu0 0.0
    %205 = vmatmul.mubr.f32.gmra.mrb[0].mxu0 %v73
    %v206 = vpop.f32.mrb[0].mxu0
    %v207 = vadd.f32 %v45, %v206
    %v208 = vpop.f32.mrb[0].mxu0
    %209 = vmatprep.mubr.f32.mxu0 0.0
    %210 = vmatmul.mubr.f32.gmra.mrb[0].mxu0 %v76
    %v211 = vpop.f32.mrb[0].mxu0
    %v212 = vadd.f32 %v45, %v211
    %v213 = vpop.f32.mrb[0].mxu0
    %214 = vmatprep.mubr.f32.mxu0 0.0
    %215 = vmatmul.mubr.f32.gmra.mrb[0].mxu0 %v79
    %v216 = vpop.f32.mrb[0].mxu0
    %v217 = vadd.f32 %v45, %v216
    %v218 = vpop.f32.mrb[0].mxu0
    %219 = vmatprep.mubr.f32.mxu0 0.0
    %220 = vmatmul.mubr.f32.gmra.mrb[0].mxu0 %v82
    %v221 = vpop.f32.mrb[0].mxu0
    %v222 = vadd.f32 %v45, %v221
    %v223 = vpop.f32.mrb[0].mxu0
    %224 = vmatprep.mubr.f32.mxu0 0.0
    %225 = vmatmul.mubr.f32.gmra.mrb[0].mxu0 %v85
    %v226 = vpop.f32.mrb[0].mxu0
    %v227 = vadd.f32 %v45, %v226
    %v228 = vpop.f32.mrb[0].mxu0
    %229 = vmatprep.mubr.f32.mxu0 0.0
    %230 = vmatmul.mubr.f32.gmra.mrb[0].mxu0 %v88
    %v231 = vpop.f32.mrb[0].mxu0
    %v232 = vadd.f32 %v45, %v231
    %v233 = vpop.f32.mrb[0].mxu0
    %234 = vmatprep.mubr.f32.mxu0 0.0
    %235 = vmatmul.mubr.f32.gmra.mrb[0].mxu0 %v91
    %v236 = vpop.f32.mrb[0].mxu0
    %v237 = vadd.f32 %v45, %v236
    %v238 = vpop.f32.mrb[0].mxu0
    %239 = vmatprep.mubr.f32.mxu0 0.0
    %240 = vmatmul.mubr.f32.gmra.mrb[0].mxu0 %v94
    %v241 = vpop.f32.mrb[0].mxu0
    %v242 = vadd.f32 %v45, %v241
    %v243 = vpop.f32.mrb[0].mxu0
    %244 = vdwg.mxu0
    %v245 = vmax.f32 %v167, 0.0
    %v246 = vmax.f32 %v172, 0.0
    %v247 = vmax.f32 %v177, 0.0
    %v248 = vmax.f32 %v182, 0.0
    %v249 = vmax.f32 %v187, 0.0
    %v250 = vmax.f32 %v192, 0.0
    %v251 = vmax.f32 %v197, 0.0
    %v252 = vmax.f32 %v202, 0.0
    %v253 = vmax.f32 %v207, 0.0
    %v254 = vmax.f32 %v212, 0.0
    %v255 = vmax.f32 %v217, 0.0
    %v256 = vmax.f32 %v222, 0.0
    %v257 = vmax.f32 %v227, 0.0
    %v258 = vmax.f32 %v232, 0.0
    %v259 = vmax.f32 %v237, 0.0
    %v260 = vmax.f32 %v242, 0.0
    %v261 = vld [vmem:[%s3] sm:$0x1]
    %s262 = sld [smem:[#allocation2]]
    %v263 = vstv %s262
    %v265 = vsel %vm47, %v261, 0
    %v268 = vsel %vm47, %v245, 0
    %v271 = vsel %vm47, %v246, 0
    %v274 = vsel %vm47, %v247, 0
    %v277 = vsel %vm47, %v248, 0
    %v280 = vsel %vm47, %v249, 0
    %v283 = vsel %vm47, %v250, 0
    %v286 = vsel %vm47, %v251, 0
    %v289 = vsel %vm47, %v252, 0
    %v292 = vsel %vm47, %v253, 0
    %v295 = vsel %vm47, %v254, 0
    %v298 = vsel %vm47, %v255, 0
    %v301 = vsel %vm47, %v256, 0
    %v304 = vsel %vm47, %v257, 0
    %v307 = vsel %vm47, %v258, 0
    %v310 = vsel %vm47, %v259, 0
    %v313 = vsel %vm47, %v260, 0
    %315 = vmatprep.subr.mxu0 0.0
    %316 = vmatpush1.xpose.msra.mxu0 %v268
    %317 = vmatprep.subr.mxu0 0.0
    %318 = vmatpush1.xpose.msra.mxu0 %v271
    %319 = vmatprep.subr.mxu0 0.0
    %320 = vmatpush1.xpose.msra.mxu0 %v274
    %321 = vmatprep.subr.mxu0 0.0
    %322 = vmatpush1.xpose.msra.mxu0 %v277
    %323 = vmatprep.subr.mxu0 0.0
    %324 = vmatpush1.xpose.msra.mxu0 %v280
    %325 = vmatprep.subr.mxu0 0.0
    %326 = vmatpush1.xpose.msra.mxu0 %v283
    %327 = vmatprep.subr.mxu0 0.0
    %328 = vmatpush1.xpose.msra.mxu0 %v286
    %329 = vmatprep.subr.mxu0 0.0
    %330 = vmatpush1.xpose.msra.mxu0 %v289
    %331 = vmatprep.subr.mxu0 0.0
    %332 = vmatpush1.xpose.msra.mxu0 %v292
    %333 = vmatprep.subr.mxu0 0.0
    %334 = vmatpush1.xpose.msra.mxu0 %v295
    %335 = vmatprep.subr.mxu0 0.0
    %336 = vmatpush1.xpose.msra.mxu0 %v298
    %337 = vmatprep.subr.mxu0 0.0
    %338 = vmatpush1.xpose.msra.mxu0 %v301
    %339 = vmatprep.subr.mxu0 0.0
    %340 = vmatpush1.xpose.msra.mxu0 %v304
    %341 = vmatprep.subr.mxu0 0.0
    %342 = vmatpush1.xpose.msra.mxu0 %v307
    %343 = vmatprep.subr.mxu0 0.0
    %344 = vmatpush1.xpose.msra.mxu0 %v310
    %345 = vmatprep.subr.mxu0 0.0
    %346 = vmatpush1.xpose.msra.mxu0 %v313
    %347 = vmatprep.subr.mxu0 0.0
    %348 = vmatpush1.xpose.msra.mxu0 0.0
    %349 = vmatprep.subr.mxu0 0.0
    %350 = vmatpush1.xpose.msra.mxu0 0.0
    %351 = vmatprep.subr.mxu0 0.0
    %352 = vmatpush1.xpose.msra.mxu0 0.0
    %353 = vmatprep.subr.mxu0 0.0
    %354 = vmatpush1.xpose.msra.mxu0 0.0
    %355 = vmatprep.subr.mxu0 0.0
    %356 = vmatpush1.xpose.msra.mxu0 0.0
    %357 = vmatprep.subr.mxu0 0.0
    %358 = vmatpush1.xpose.msra.mxu0 0.0
    %359 = vmatprep.subr.mxu0 0.0
    %360 = vmatpush1.xpose.msra.mxu0 0.0
    %361 = vmatprep.subr.mxu0 0.0
    %362 = vmatpush1.xpose.msra.mxu0 0.0
    %363 = vmatprep.subr.mxu0 0.0
    %364 = vmatpush1.xpose.msra.mxu0 0.0
    %365 = vmatprep.subr.mxu0 0.0
    %366 = vmatpush1.xpose.msra.mxu0 0.0
    %367 = vmatprep.subr.mxu0 0.0
    %368 = vmatpush1.xpose.msra.mxu0 0.0
    %369 = vmatprep.subr.mxu0 0.0
    %370 = vmatpush1.xpose.msra.mxu0 0.0
    %371 = vmatprep.subr.mxu0 0.0
    %372 = vmatpush1.xpose.msra.mxu0 0.0
    %373 = vmatprep.subr.mxu0 0.0
    %374 = vmatpush1.xpose.msra.mxu0 0.0
    %375 = vmatprep.subr.mxu0 0.0
    %376 = vmatpush1.xpose.msra.mxu0 0.0
    %377 = vmatprep.subr.mxu0 0.0
    %378 = vmatpush1.xpose.msra.mxu0 0.0
    %379 = vmatprep.mubr.f32.mxu0 0.0
    %380 = vmatmul.mubr.f32.gmra.mrb[0].mxu0 %v265
    %v381 = vpop.f32.mrb[0].mxu0
    %v382 = vadd.f32 %v263, %v381
    %v383 = vpop.f32.mrb[0].mxu0
    %384 = vdwg.mxu0
    %385 = vst [vmem:[#allocation3] sm:$0x1] %v382
    // Predicated region
    $region22: #{tpu_custom_call.1} parent=1 // pred_check
      _
    $region23: #{tpu_custom_call.1} parent=1 // pred_check_branch
      %387 = sbr.rel (0) target = $region25
    $region24: #{tpu_custom_call.1} parent=1 // pred_region
      %s389 = ssub.s32 16, 16
      %390 = vsyncadd [#allocation4], %s389
      %s392 = sshll.u32 [#allocation3], 4
      %s393 = int_to_ptr.vmem [resolvable:$true] %s392
      %395 = dma.vmem_to_hbm [thread:$0]  %s393, 16, %s5, [#allocation4]
    $region25: #{tpu_custom_call.1} parent=1 // pred_fallthru
      _
    // Predicated region
    $region26: #{tpu_custom_call.1} parent=1 // pred_check
      _
    $region27: #{tpu_custom_call.1} parent=1 // pred_check_branch
      %397 = sbr.rel (0) target = $region29
    $region28: #{tpu_custom_call.1} parent=1 // pred_region
      %398 = dma.done [#allocation4], 16
    $region29: #{tpu_custom_call.1} parent=1 // pred_fallthru
      _
    %399 = vsyncpa [#allocation4], 1

</llo_original>
